<compile_context>
chip_gen: v7x
topology: tpu7x:2x2x1
jax: 0.10.0
libtpu: 0.0.40
codegen_flags: <defaults>
</compile_context>

<pallas_src>
import math

import jax
import jax.numpy as jnp
from jax.experimental import pallas as pl
from jax.experimental.pallas import tpu as pltpu

_LANE = 128
_SUBLANE = 8
_SMALL_INPUT_BYTES = 128 * 1024          # below this, plain XLA wins
_MAX_FOLD_WIDTH = 4096                   # cap on lane-folded row width
_MIN_BYTES_FOR_ROW_SPLIT = 2 * 1024 * 1024


def _vmem_budget():
    """Per-generation (target_block_bytes, vmem_limit_bytes)."""
    try:
        vmem = pltpu.get_tpu_info().vmem_capacity_bytes
    except Exception:
        vmem = 64 * 1024 * 1024          # conservative (v7x-safe) default
    if vmem >= 128 * 1024 * 1024:        # v5e / v6e: 128 MiB physical VMEM
        return 8 * 1024 * 1024, 64 * 1024 * 1024
    return 4 * 1024 * 1024, 32 * 1024 * 1024   # v7x: 64 MiB per TC


def _choose_tiles(rows, cols, itemsize, target_block_bytes):
    """Pick (row_tile, feature_tile) for pipelined, lane-dense blocks."""
    row_bytes = cols * itemsize
    # Feature tile: keep full rows (single contiguous DMA run per row and
    # scale/shift fetched once) as long as >= 8 rows still fit the budget.
    if cols <= _LANE or row_bytes * _SUBLANE <= target_block_bytes:
        tf = cols
    else:
        tf = max(_LANE,
                 ((target_block_bytes // (_SUBLANE * itemsize)) // _LANE) * _LANE)
        tf = min(tf, cols)
    n_ft = pl.cdiv(cols, tf)

    max_rows = max(_SUBLANE, target_block_bytes // max(1, tf * itemsize))
    if max_rows >= rows:
        total_bytes = rows * cols * itemsize
        # Avoid the degenerate (1, 1) grid on non-tiny arrays: keep >= ~4 row
        # steps so double-buffering is active and v7x shards across 2 TCs.
        if n_ft == 1 and total_bytes > _MIN_BYTES_FOR_ROW_SPLIT and rows > 4 * _SUBLANE:
            tb = max(_SUBLANE, ((rows // 4) // _SUBLANE) * _SUBLANE)
        else:
            tb = rows
    else:
        tb = max(_SUBLANE, (max_rows // _SUBLANE) * _SUBLANE)
    return tb, tf


def _diag_scale_shift_kernel(x_ref, scale_ref, shift_ref, o_ref):
    # out = scale * (x - shift); scale/shift are (1, tf), broadcast over rows.
    x = x_ref[...].astype(jnp.float32)
    o_ref[...] = (scale_ref[...] * (x - shift_ref[...])).astype(o_ref.dtype)


def diagonal_scale_shift(x, scale, shift, *, tb=None, tf=None,
                         use_pallas=None, donate_x=False):
    """Apply y = scale * (x - shift).

    x:          [..., F] (leading dims flattened into a row axis)
    scale/shift: scalar or [F] (anything else falls back to plain-XLA broadcast)
    tb/tf:      optional tile overrides (tb mult. of 8, tf mult. of 128 unless
                equal to the full extent) for sweeping.
    use_pallas: None = auto (skip kernel for tiny inputs), True/False = force.
    donate_x:   alias the output onto x2's HBM buffer (footprint only; note
                the alias is on the reshaped intermediate, not x itself).
    """
    orig_shape = x.shape
    F = orig_shape[-1]

    scale_a = jnp.asarray(scale, jnp.float32)
    shift_a = jnp.asarray(shift, jnp.float32)

    def _jnp_path():
        y = scale_a * (x.astype(jnp.float32) - shift_a)
        return y.astype(x.dtype)

    # Coerce params to per-feature vectors; other shapes use the XLA fallback
    # (preserves the module's general broadcasting semantics).
    if scale_a.size == 1:
        scale_v = jnp.full((F,), scale_a.reshape(()), dtype=jnp.float32)
    elif scale_a.size == F:
        scale_v = scale_a.reshape(F)
    else:
        scale_v = None
    if shift_a.size == 1:
        shift_v = jnp.full((F,), shift_a.reshape(()), dtype=jnp.float32)
    elif shift_a.size == F:
        shift_v = shift_a.reshape(F)
    else:
        shift_v = None

    size_bytes = x.size * jnp.dtype(x.dtype).itemsize
    if use_pallas is False or scale_v is None or shift_v is None:
        return _jnp_path()
    if use_pallas is None and size_bytes <= _SMALL_INPUT_BYTES:
        # Tiny inputs: pallas_call launch + fixed per-step cost dominates.
        return _jnp_path()

    x2 = x.reshape(-1, F)
    R, C = x2.shape

    # Lane-density fold: if F is not a multiple of 128, fold batch rows into
    # the lane axis at width lcm(F, 128), tiling scale/shift so the broadcast
    # lines up -> unmasked lane-dense stores (biggest measured lever).
    if C % _LANE != 0:
        W = (C * _LANE) // math.gcd(C, _LANE)
        if W <= _MAX_FOLD_WIDTH and (R * C) % W == 0:
            rep = W // C
            x2 = x2.reshape((R * C) // W, W)
            scale2 = jnp.tile(scale_v, rep).reshape(1, W)
            shift2 = jnp.tile(shift_v, rep).reshape(1, W)
            R, C = x2.shape
        else:
            # TODO(synk): pad F up to a multiple of 128 here; this branch is
            # correct but tail-lane stores are masked (perf only).
            scale2 = scale_v.reshape(1, C)
            shift2 = shift_v.reshape(1, C)
    else:
        scale2 = scale_v.reshape(1, C)
        shift2 = shift_v.reshape(1, C)

    target_block_bytes, vmem_limit_bytes = _vmem_budget()
    auto_tb, auto_tf = _choose_tiles(R, C, jnp.dtype(x2.dtype).itemsize,
                                     target_block_bytes)
    tb = min(tb if tb is not None else auto_tb, R)
    tf = min(tf if tf is not None else auto_tf, C)

    n_ft = pl.cdiv(C, tf)
    n_rt = pl.cdiv(R, tb)
    # Feature tiles outer, rows innermost: scale/shift blocks are invariant
    # across the inner loop, so they are not re-DMA'd each step.
    grid = (n_ft, n_rt)

    # 3-deep input buffering hides HBM read/write contention on this purely
    # streaming kernel. VMEM: 3*blk (x) + 2*blk (out) + params << vmem limit.
    if n_ft * n_rt >= 3:
        x_spec = pl.BlockSpec((tb, tf), lambda j, i: (i, j),
                              pipeline_mode=pl.Buffered(3))
    else:
        x_spec = pl.BlockSpec((tb, tf), lambda j, i: (i, j))

    out2 = pl.pallas_call(
        _diag_scale_shift_kernel,
        out_shape=jax.ShapeDtypeStruct((R, C), x.dtype),
        grid_spec=pltpu.PrefetchScalarGridSpec(
            num_scalar_prefetch=0,
            grid=grid,
            in_specs=[
                x_spec,                                         # x tile
                pl.BlockSpec((1, tf), lambda j, i: (0, j)),     # scale (row-invariant)
                pl.BlockSpec((1, tf), lambda j, i: (0, j)),     # shift (row-invariant)
            ],
            out_specs=pl.BlockSpec((tb, tf), lambda j, i: (i, j)),
        ),
        compiler_params=pltpu.CompilerParams(
            dimension_semantics=("parallel", "parallel"),
            vmem_limit_bytes=vmem_limit_bytes,
        ),
        input_output_aliases={0: 0} if donate_x else {},
    )(x2, scale2, shift2)

    return out2.reshape(orig_shape)


if __name__ == "__main__":
    key = jax.random.PRNGKey(0)
    kx, ks, kh = jax.random.split(key, 3)

    def ref_fn(x, scale, shift):
        y = (jnp.asarray(scale, jnp.float32)
             * (x.astype(jnp.float32) - jnp.asarray(shift, jnp.float32)))
        return y.astype(x.dtype)

    ok = True

    # 1) Tiny smoke-test shape -> auto path (plain XLA fast path).
    B, F = 8, 32
    x = jax.random.normal(kx, (B, F), dtype=jnp.float32)
    scale = 1.0 + 0.1 * jax.random.normal(ks, (F,), dtype=jnp.float32)
    shift = 0.5 * jax.random.normal(kh, (F,), dtype=jnp.float32)
    out = jax.block_until_ready(diagonal_scale_shift(x, scale, shift))
    ok &= bool(jnp.allclose(out, ref_fn(x, scale, shift), atol=1e-5, rtol=1e-5))

    # 2) Same tiny shape forced through the kernel (lane-fold F=32 -> 128).
    out = jax.block_until_ready(
        diagonal_scale_shift(x, scale, shift, use_pallas=True))
    ok &= bool(jnp.allclose(out, ref_fn(x, scale, shift), atol=1e-5, rtol=1e-5))

    # 3) 3-D input with F=192 (not a multiple of 128 -> lcm fold to width 384).
    x3 = jax.random.normal(kx, (2, 96, 192), dtype=jnp.float32)
    scale3 = 1.0 + 0.05 * jax.random.normal(ks, (192,), dtype=jnp.float32)
    shift3 = 0.3 * jax.random.normal(kh, (192,), dtype=jnp.float32)
    out3 = jax.block_until_ready(
        diagonal_scale_shift(x3, scale3, shift3, use_pallas=True))
    ok &= bool(jnp.allclose(out3, ref_fn(x3, scale3, shift3), atol=1e-5, rtol=1e-5))

    # 4) Scalar scale/shift (from_data style), F a multiple of 128, no fold.
    x4 = jax.random.normal(kx, (160, 256), dtype=jnp.float32)
    out4 = jax.block_until_ready(
        diagonal_scale_shift(x4, 1.7, 0.25, use_pallas=True))
    ok &= bool(jnp.allclose(out4, ref_fn(x4, 1.7, 0.25), atol=1e-5, rtol=1e-5))

    # 5) Larger array: exercises row splitting, multi-step grid and Buffered(3).
    x5 = jax.random.normal(kx, (1024, 768), dtype=jnp.float32)
    scale5 = 1.0 + 0.1 * jax.random.normal(ks, (768,), dtype=jnp.float32)
    shift5 = 0.5 * jax.random.normal(kh, (768,), dtype=jnp.float32)
    out5 = jax.block_until_ready(
        diagonal_scale_shift(x5, scale5, shift5, use_pallas=True))
    ok &= bool(jnp.allclose(out5, ref_fn(x5, scale5, shift5), atol=1e-5, rtol=1e-5))

    # 6) bf16 input (kernel computes in f32, casts back to bf16).
    x6 = jax.random.normal(kx, (256, 384), dtype=jnp.bfloat16)
    scale6 = 1.0 + 0.1 * jax.random.normal(ks, (384,), dtype=jnp.float32)
    shift6 = 0.5 * jax.random.normal(kh, (384,), dtype=jnp.float32)
    out6 = jax.block_until_ready(
        diagonal_scale_shift(x6, scale6, shift6, use_pallas=True))
    ok &= bool(jnp.allclose(out6.astype(jnp.float32),
                            ref_fn(x6, scale6, shift6).astype(jnp.float32),
                            atol=2e-2, rtol=2e-2))

    assert ok
    print("KERNEL_OK")
</pallas_src>

<mosaic_0001>
module attributes {stable_mosaic.version = 11 : i64} {
  func.func @_diag_scale_shift_kernel(%arg0: i32, %arg1: i32, %arg2: memref<2x128xf32, #tpu.memory_space<vmem>>, %arg3: memref<1x128xf32, #tpu.memory_space<vmem>>, %arg4: memref<1x128xf32, #tpu.memory_space<vmem>>, %arg5: memref<2x128xf32, #tpu.memory_space<vmem>>) attributes {dimension_semantics = [#tpu.dimension_semantics<parallel>, #tpu.dimension_semantics<parallel>], iteration_bounds = array<i64: 1, 1>, scalar_prefetch = 0 : i64, scratch_operands = 0 : i64, tpu.core_type = #tpu.core_type<tc>, window_params = [{transform_indices = @transform_0, window_bounds = array<i64: 2, 128>}, {transform_indices = @transform_1, window_bounds = array<i64: 1, 128>}, {transform_indices = @transform_2, window_bounds = array<i64: 1, 128>}, {transform_indices = @transform_3, window_bounds = array<i64: 2, 128>}]} {
    %c0 = arith.constant 0 : index
    %c0_0 = arith.constant 0 : index
    %0 = vector.load %arg2[%c0, %c0_0] : memref<2x128xf32, #tpu.memory_space<vmem>>, vector<2x128xf32>
    %c0_1 = arith.constant 0 : index
    %c0_2 = arith.constant 0 : index
    %1 = vector.load %arg3[%c0_1, %c0_2] : memref<1x128xf32, #tpu.memory_space<vmem>>, vector<1x128xf32>
    %c0_3 = arith.constant 0 : index
    %c0_4 = arith.constant 0 : index
    %2 = vector.load %arg4[%c0_3, %c0_4] : memref<1x128xf32, #tpu.memory_space<vmem>>, vector<1x128xf32>
    %3 = vector.broadcast %2 : vector<1x128xf32> to vector<2x128xf32>
    %4 = arith.subf %0, %3 : vector<2x128xf32>
    %5 = vector.broadcast %1 : vector<1x128xf32> to vector<2x128xf32>
    %6 = arith.mulf %5, %4 : vector<2x128xf32>
    %c0_5 = arith.constant 0 : index
    %c0_6 = arith.constant 0 : index
    %7 = vector.load %arg5[%c0_5, %c0_6] : memref<2x128xf32, #tpu.memory_space<vmem>>, vector<2x128xf32>
    tpu.vector_store %arg5[%c0_5, %c0_6], %6 {strides = array<i32>} : memref<2x128xf32, #tpu.memory_space<vmem>>, vector<2x128xf32>,
    return
  }
  func.func @transform_0(%arg0: i32, %arg1: i32) -> (i32, i32) {
    %c0_i32 = arith.constant 0 : i32
    return %arg1, %arg0 : i32, i32
  }
  func.func @transform_1(%arg0: i32, %arg1: i32) -> (i32, i32) {
    %c0_i32 = arith.constant 0 : i32
    %c0_i32_0 = arith.constant 0 : i32
    return %c0_i32, %arg0 : i32, i32
  }
  func.func @transform_2(%arg0: i32, %arg1: i32) -> (i32, i32) {
    %c0_i32 = arith.constant 0 : i32
    %c0_i32_0 = arith.constant 0 : i32
    return %c0_i32, %arg0 : i32, i32
  }
  func.func @transform_3(%arg0: i32, %arg1: i32) -> (i32, i32) {
    %c0_i32 = arith.constant 0 : i32
    return %arg1, %arg0 : i32, i32
  }
}

</mosaic_0001>

<llo_original>
// kernel: tpu_custom_call.1
$region0: #{tpu_custom_call.1}
  #allocation0 [shape = 'u32[]', space=smem, size = 0x4, offset = 0x4, fixed_abs, tag = 'smem constant byte address 0x4 - core index']
  #allocation1 [shape = 'u32[144,128]{1,0:T(1,128)}', space=vmem, size = 0x12000, scoped, tag = 'internal scratch']
  %s0 = inlined_call_operand.hbm [shape: f32[2,128], index: 0, kind: input, shape index: {}]
  %s1 = inlined_call_operand.vmem [shape: f32[1,128], index: 1, kind: input, shape index: {}]
  %s2 = inlined_call_operand.vmem [shape: f32[1,128], index: 2, kind: input, shape index: {}]
  %s3 = inlined_call_operand.hbm [shape: f32[2,128], index: 3, kind: output, shape index: {}]
  %s4 = sld [smem:[#allocation0]]
  $region26: #{tpu_custom_call.1} parent=0
    _
  %s6 = ssub.s32 1, %s4
  %s7 = scalar_select 0, %s6, %s4
  $region1: #{tpu_custom_call.1} parent=0
    #allocation2 [shape = 'u8[1024]{0}', space=vmem, size = 0x400, scoped, tag = 'input window, operand 0, single buffered']
    #allocation3 [shape = 's32[1]{0}', space=sflag, size = 0x4, scoped, tag = 'scoped memory for tpu_custom_call.1']
    #allocation4 [shape = 's32[1]{0}', space=sflag, size = 0x4, scoped, tag = 'scoped memory for tpu_custom_call.1']
    #allocation5 [shape = 'u8[1024]{0}', space=vmem, size = 0x400, scoped, tag = 'output window, operand 0, single buffered']
    %8 = vsyncpa [#allocation3], 0
    %9 = vsyncpa [#allocation4], 0
    // Predicated region
    $region2: #{tpu_custom_call.1} parent=1 // pred_check
      _
    $region3: #{tpu_custom_call.1} parent=1 // pred_check_branch
      %11 = sbr.rel (0) target = $region5
    $region4: #{tpu_custom_call.1} parent=1 // pred_region
      %s13 = ssub.s32 32, 32
      %14 = vsyncadd [#allocation3], %s13
      %s16 = sshll.u32 [#allocation2], 4
      %s17 = int_to_ptr.vmem [resolvable:$true] %s16
      %19 = dma.hbm_to_vmem [thread:$0]  %s0, 32, %s17, [#allocation3]
    $region5: #{tpu_custom_call.1} parent=1 // pred_fallthru
      _
    // Predicated region
    $region6: #{tpu_custom_call.1} parent=1 // pred_check
      _
    $region7: #{tpu_custom_call.1} parent=1 // pred_check_branch
      %21 = sbr.rel (0) target = $region9
    $region8: #{tpu_custom_call.1} parent=1 // pred_region
      _
    $region9: #{tpu_custom_call.1} parent=1 // pred_fallthru
      _
    // Predicated region
    $region10: #{tpu_custom_call.1} parent=1 // pred_check
      _
    $region11: #{tpu_custom_call.1} parent=1 // pred_check_branch
      %23 = sbr.rel (0) target = $region13
    $region12: #{tpu_custom_call.1} parent=1 // pred_region
      _
    $region13: #{tpu_custom_call.1} parent=1 // pred_fallthru
      _
    // Predicated region
    $region14: #{tpu_custom_call.1} parent=1 // pred_check
      _
    $region15: #{tpu_custom_call.1} parent=1 // pred_check_branch
      %25 = sbr.rel (0) target = $region17
    $region16: #{tpu_custom_call.1} parent=1 // pred_region
      %26 = dma.done [#allocation3], 32
    $region17: #{tpu_custom_call.1} parent=1 // pred_fallthru
      _
    %v27 = vld [vmem:[#allocation2] sm:$0x3]
    %v28 = vld [vmem:[%s1] sm:$0x1]
    %v29 = vld [vmem:[%s2] sm:$0x1]
    %v31 = vlaneseq
    %v32 = vshrl.u32 %v31, 7
    %v33 = vsub.s32 0, %v32
    %v34 = vrot.slane %v29, %v33
    %v36 = vsub.f32 %v27, %v34
    %v38 = vlaneseq
    %v39 = vshrl.u32 %v38, 7
    %v40 = vsub.s32 0, %v39
    %v41 = vrot.slane %v28, %v40
    %v43 = vmul.f32 %v41, %v36
    %44 = vst [vmem:[#allocation5] sm:$0x3] %v43
    // Predicated region
    $region18: #{tpu_custom_call.1} parent=1 // pred_check
      _
    $region19: #{tpu_custom_call.1} parent=1 // pred_check_branch
      %46 = sbr.rel (0) target = $region21
    $region20: #{tpu_custom_call.1} parent=1 // pred_region
      %s48 = ssub.s32 32, 32
      %49 = vsyncadd [#allocation4], %s48
      %s51 = sshll.u32 [#allocation5], 4
      %s52 = int_to_ptr.vmem [resolvable:$true] %s51
      %54 = dma.vmem_to_hbm [thread:$0]  %s52, 32, %s3, [#allocation4]
    $region21: #{tpu_custom_call.1} parent=1 // pred_fallthru
      _
    // Predicated region
    $region22: #{tpu_custom_call.1} parent=1 // pred_check
      _
    $region23: #{tpu_custom_call.1} parent=1 // pred_check_branch
      %56 = sbr.rel (0) target = $region25
    $region24: #{tpu_custom_call.1} parent=1 // pred_region
      %57 = dma.done [#allocation4], 32
    $region25: #{tpu_custom_call.1} parent=1 // pred_fallthru
      _
    %58 = vsyncpa [#allocation3], 1
    %59 = vsyncpa [#allocation4], 1

</llo_original>
